<compile_context>
chip_gen: v7x
topology: tpu7x:2x2x1
jax: 0.10.0
libtpu: 0.0.40
codegen_flags: <defaults>
</compile_context>

<pallas_src>
import functools

import jax
import jax.numpy as jnp
from jax.experimental import pallas as pl
from jax.experimental.pallas import tpu as pltpu


# ---------------------------------------------------------------------------
# Exact (erf) GELU built only from ops with guaranteed Mosaic lowerings.
# ---------------------------------------------------------------------------
_ERF_P = 0.3275911
_ERF_A1 = 0.254829592
_ERF_A2 = -0.284496736
_ERF_A3 = 1.421413741
_ERF_A4 = -1.453152027
_ERF_A5 = 1.061405429
_INV_SQRT2 = 0.7071067811865476


def _erf(z):
    # Abramowitz & Stegun 7.1.26, max abs error ~1.5e-7 (matches torch's exact
    # erf GELU to well below f32 test tolerance).
    sgn = jnp.where(z < 0.0, -1.0, 1.0)
    za = jnp.abs(z)
    t = 1.0 / (1.0 + _ERF_P * za)
    poly = t * (_ERF_A1 + t * (_ERF_A2 + t * (_ERF_A3 + t * (_ERF_A4 + t * _ERF_A5))))
    return sgn * (1.0 - poly * jnp.exp(-za * za))


def _gelu_exact(u):
    # torch.nn.GELU() default (exact erf form).
    return 0.5 * u * (1.0 + _erf(u * _INV_SQRT2))


# ---------------------------------------------------------------------------
# Kernel
# ---------------------------------------------------------------------------
def _aug_adapter_kernel(x_ref, k_ref, w1_ref, b1_ref, wa_ref, ba_ref,
                        w2_ref, b2_ref, o_ref, *, skip_connect):
    # x_ref : (TM, D)   token tile (native dtype: f32 or bf16)
    # k_ref : (TM, NH)  matching tile of important_key
    # w1_ref: (D, Dh)   D_fc1 weight, (in, out) layout
    # wa_ref: (NH, Dh)  aug_fc weight, (in, out) layout
    # w2_ref: (Dh, D)   D_fc2 weight, (in, out) layout
    # b*_ref: (1, Dh) / (1, D) f32 biases
    x = x_ref[...]
    k = k_ref[...]

    # D_fc1(x): native-dtype MXU matmul, f32 accumulation.
    h = jnp.dot(x, w1_ref[...], preferred_element_type=jnp.float32) + b1_ref[...]
    # aug_fc(important_key)
    a = jnp.dot(k, wa_ref[...], preferred_element_type=jnp.float32) + ba_ref[...]
    # Exact erf GELU of the product, in f32 (VPU/EUP).
    g = _gelu_exact(h * a)
    # D_fc2: feed the MXU in the weight dtype (bf16 stays bf16), f32 acc.
    y = jnp.dot(g.astype(w2_ref.dtype), w2_ref[...],
                preferred_element_type=jnp.float32) + b2_ref[...]
    if skip_connect:
        y = y + x.astype(jnp.float32)
    o_ref[...] = y.astype(o_ref.dtype)


# ---------------------------------------------------------------------------
# VMEM budgeting / tile selection
# ---------------------------------------------------------------------------
def _round_down8(v):
    return max(8, (v // 8) * 8)


def _vmem_bytes(tm, D, Dh, NH, stream_itemsize, w_itemsize):
    # Double-buffered streams: x in, out, important_key in.
    streams = 2 * tm * (2 * D * stream_itemsize + NH * stream_itemsize)
    # Single-buffered resident weights + f32 biases.
    params = (D * Dh + NH * Dh + Dh * D) * w_itemsize + (2 * Dh + D) * 4
    # f32 intermediates materialized per step (h, a, gelu, y, upcast x).
    interim = tm * (3 * Dh + 2 * D) * 4
    return streams + params + interim


def _vmem_capacity_bytes():
    try:
        cap = getattr(pltpu.get_tpu_info(), "vmem_capacity_bytes", None)
        if cap:
            return int(cap)
    except Exception:
        pass
    return 64 << 20          # conservative default (v7x-sized per-core VMEM)


def _choose_block_m(M, D, Dh, NH, stream_itemsize, w_itemsize, block_m, budget):
    tm = _round_down8(min(block_m, max(M, 8)))
    while tm > 8 and _vmem_bytes(tm, D, Dh, NH, stream_itemsize, w_itemsize) > budget:
        tm = _round_down8(tm // 2)
    if tm >= M:
        return M                         # single full-extent tile (8/128 rule waived)
    # Keep >= 8 grid steps when M allows (pipelining + v7x megacore split),
    # but never shrink below 256 rows (per-step overhead amortization).
    steps = -(-M // tm)
    if steps < 8:
        tm = min(tm, max(256, _round_down8(M // 8)))
        tm = min(tm, M)
    return tm


# ---------------------------------------------------------------------------
# Parameter prep (call once; hoists transpose/cast out of the hot path)
# ---------------------------------------------------------------------------
def prepare_aug_adapter_params(w1, b1, wa, ba, w2, b2, dtype=None):
    """Convert torch.nn.Linear parameters (weight (out,in), bias (out,)) to
    MXU-friendly (in,out) layout in `dtype` (the matmul dtype; default: the
    weights' own dtype), with f32 row-vector biases."""
    w1 = jnp.asarray(w1)
    wa = jnp.asarray(wa)
    w2 = jnp.asarray(w2)
    if dtype is None:
        dtype = w1.dtype
    Dh, D = w1.shape
    return dict(
        w1=w1.T.astype(dtype),                             # (D, Dh)
        wa=wa.T.astype(dtype),                             # (NH, Dh)
        w2=w2.T.astype(dtype),                             # (Dh, D)
        b1=jnp.asarray(b1, jnp.float32).reshape(1, Dh),
        ba=jnp.asarray(ba, jnp.float32).reshape(1, Dh),
        b2=jnp.asarray(b2, jnp.float32).reshape(1, D),
    )


# ---------------------------------------------------------------------------
# Forward wrapper
# ---------------------------------------------------------------------------
def aug_adapter(x, important_key, params, *, skip_connect=True, block_m=1024):
    """AugAdapter forward.

    x:             (..., D_features)
    important_key: (..., num_heads), same leading dims as x
    params:        output of prepare_aug_adapter_params (pre-transposed).
    """
    orig_shape = x.shape
    D = x.shape[-1]
    NH = important_key.shape[-1]
    w1, wa, w2 = params["w1"], params["wa"], params["w2"]
    b1, ba, b2 = params["b1"], params["ba"], params["b2"]
    Dh = w1.shape[1]

    # Lane-dense layout: flatten every leading dim into one token axis.
    x2 = x.reshape(-1, D)
    k2 = important_key.reshape(-1, NH)
    M = x2.shape[0]

    s_item = x2.dtype.itemsize
    w_item = w1.dtype.itemsize
    cap = _vmem_capacity_bytes()
    budget = min(cap // 2, 64 << 20)
    tm = _choose_block_m(M, D, Dh, NH, s_item, w_item, block_m, budget)
    grid = (pl.cdiv(M, tm),)
    est = _vmem_bytes(tm, D, Dh, NH, s_item, w_item)
    vmem_limit = int(min(cap * 3 // 4, max(32 << 20, 2 * est)))

    kernel = functools.partial(_aug_adapter_kernel, skip_connect=skip_connect)
    resident = dict(pipeline_mode=pl.Buffered(1))   # fetched once, kept resident

    # TODO(synk): for configurations with D or Dh < 128 (lane-sparse) the
    # kernel is correct but pays masked partial stores; production SAMUS
    # widths (D=768, Dh=192) are already lane-dense.
    out = pl.pallas_call(
        kernel,
        out_shape=jax.ShapeDtypeStruct((M, D), x.dtype),
        grid=grid,
        in_specs=[
            pl.BlockSpec((tm, D), lambda i: (i, 0)),                # x stream
            pl.BlockSpec((tm, NH), lambda i: (i, 0)),               # key stream
            pl.BlockSpec((D, Dh), lambda i: (0, 0), **resident),    # W1^T
            pl.BlockSpec((1, Dh), lambda i: (0, 0), **resident),    # b1
            pl.BlockSpec((NH, Dh), lambda i: (0, 0), **resident),   # Wa^T
            pl.BlockSpec((1, Dh), lambda i: (0, 0), **resident),    # ba
            pl.BlockSpec((Dh, D), lambda i: (0, 0), **resident),    # W2^T
            pl.BlockSpec((1, D), lambda i: (0, 0), **resident),     # b2
        ],
        out_specs=pl.BlockSpec((tm, D), lambda i: (i, 0)),
        compiler_params=pltpu.CompilerParams(
            dimension_semantics=("parallel",),
            vmem_limit_bytes=vmem_limit),
    )(x2, k2, w1, b1, wa, ba, w2, b2)

    return out.reshape(orig_shape)


# ---------------------------------------------------------------------------
# Pure-JAX reference (f32, exact erf GELU — torch.nn.GELU default)
# ---------------------------------------------------------------------------
def _reference(x, important_key, w1, b1, wa, ba, w2, b2, skip_connect=True):
    x = x.astype(jnp.float32)
    important_key = important_key.astype(jnp.float32)
    w1 = jnp.asarray(w1, jnp.float32)
    wa = jnp.asarray(wa, jnp.float32)
    w2 = jnp.asarray(w2, jnp.float32)
    xs = x @ w1.T + jnp.asarray(b1, jnp.float32)
    aug = important_key @ wa.T + jnp.asarray(ba, jnp.float32)
    xs = jax.nn.gelu(xs * aug, approximate=False)
    xs = xs @ w2.T + jnp.asarray(b2, jnp.float32)
    return x + xs if skip_connect else xs


if __name__ == "__main__":
    key = jax.random.PRNGKey(0)
    ks = jax.random.split(key, 8)

    # --- Test 1: small shapes matching the module defaults -----------------
    B, S = 2, 8
    D_features, mlp_ratio, num_heads = 32, 0.25, 12
    Dh = int(D_features * mlp_ratio)                       # 8

    x = jax.random.normal(ks[0], (B, S, D_features), dtype=jnp.float32)
    ik = jax.random.normal(ks[1], (B, S, num_heads), dtype=jnp.float32)
    w1 = 0.1 * jax.random.normal(ks[2], (Dh, D_features), dtype=jnp.float32)
    b1 = 0.1 * jax.random.normal(ks[3], (Dh,), dtype=jnp.float32)
    wa = 0.1 * jax.random.normal(ks[4], (Dh, num_heads), dtype=jnp.float32)
    ba = 0.1 * jax.random.normal(ks[5], (Dh,), dtype=jnp.float32)
    w2 = 0.1 * jax.random.normal(ks[6], (D_features, Dh), dtype=jnp.float32)
    b2 = 0.1 * jax.random.normal(ks[7], (D_features,), dtype=jnp.float32)

    params = prepare_aug_adapter_params(w1, b1, wa, ba, w2, b2)
    out = jax.block_until_ready(aug_adapter(x, ik, params))
    ref = _reference(x, ik, w1, b1, wa, ba, w2, b2)
    assert out.shape == x.shape and out.dtype == x.dtype
    assert jnp.allclose(out, ref, atol=2e-5, rtol=2e-5), "f32 small-shape mismatch"

    # --- Test 2: lane-dense widths, multi-step grid, partial last tile -----
    B2, S2 = 1, 600                                        # M=600, block_m=256 -> 3 steps
    D2, Dh2, NH2 = 512, 128, 12
    ks2 = jax.random.split(jax.random.PRNGKey(1), 8)
    x2 = jax.random.normal(ks2[0], (B2, S2, D2), dtype=jnp.float32)
    ik2 = jax.random.normal(ks2[1], (B2, S2, NH2), dtype=jnp.float32)
    w1b = 0.1 * jax.random.normal(ks2[2], (Dh2, D2), dtype=jnp.float32)
    b1b = 0.1 * jax.random.normal(ks2[3], (Dh2,), dtype=jnp.float32)
    wab = 0.1 * jax.random.normal(ks2[4], (Dh2, NH2), dtype=jnp.float32)
    bab = 0.1 * jax.random.normal(ks2[5], (Dh2,), dtype=jnp.float32)
    w2b = 0.1 * jax.random.normal(ks2[6], (D2, Dh2), dtype=jnp.float32)
    b2b = 0.1 * jax.random.normal(ks2[7], (D2,), dtype=jnp.float32)

    params_f32 = prepare_aug_adapter_params(w1b, b1b, wab, bab, w2b, b2b)
    out2 = jax.block_until_ready(aug_adapter(x2, ik2, params_f32, block_m=256))
    ref2 = _reference(x2, ik2, w1b, b1b, wab, bab, w2b, b2b)
    assert jnp.allclose(out2, ref2, atol=5e-5, rtol=5e-5), "f32 tiled mismatch"

    # --- Test 3: bf16 activations + bf16 weights on the MXU ----------------
    x_bf = x2.astype(jnp.bfloat16)
    ik_bf = ik2.astype(jnp.bfloat16)
    params_bf = prepare_aug_adapter_params(w1b, b1b, wab, bab, w2b, b2b,
                                           dtype=jnp.bfloat16)
    out_bf = jax.block_until_ready(aug_adapter(x_bf, ik_bf, params_bf, block_m=256))
    assert out_bf.dtype == jnp.bfloat16
    ref_bf = _reference(x_bf, ik_bf,
                        w1b.astype(jnp.bfloat16), b1b,
                        wab.astype(jnp.bfloat16), bab,
                        w2b.astype(jnp.bfloat16), b2b)
    rel = (jnp.linalg.norm(out_bf.astype(jnp.float32) - ref_bf)
           / jnp.linalg.norm(ref_bf))
    assert rel < 3e-2, f"bf16 mismatch: rel err {rel}"

    print("KERNEL_OK")
</pallas_src>

<mosaic_0001>
module attributes {stable_mosaic.version = 11 : i64} {
  func.func @_aug_adapter_kernel(%arg0: i32, %arg1: memref<16x32xf32, #tpu.memory_space<vmem>>, %arg2: memref<16x12xf32, #tpu.memory_space<vmem>>, %arg3: memref<32x8xf32, #tpu.memory_space<vmem>>, %arg4: memref<1x8xf32, #tpu.memory_space<vmem>>, %arg5: memref<12x8xf32, #tpu.memory_space<vmem>>, %arg6: memref<1x8xf32, #tpu.memory_space<vmem>>, %arg7: memref<8x32xf32, #tpu.memory_space<vmem>>, %arg8: memref<1x32xf32, #tpu.memory_space<vmem>>, %arg9: memref<16x32xf32, #tpu.memory_space<vmem>>) attributes {dimension_semantics = [#tpu.dimension_semantics<parallel>], iteration_bounds = array<i64: 1>, scalar_prefetch = 0 : i64, scratch_operands = 0 : i64, tpu.core_type = #tpu.core_type<tc>, window_params = [{transform_indices = @transform_0, window_bounds = array<i64: 16, 32>}, {transform_indices = @transform_1, window_bounds = array<i64: 16, 12>}, {pipeline_mode = #tpu.pipeline_mode<synchronous>, transform_indices = @transform_2, window_bounds = array<i64: 32, 8>}, {pipeline_mode = #tpu.pipeline_mode<synchronous>, transform_indices = @transform_3, window_bounds = array<i64: 1, 8>}, {pipeline_mode = #tpu.pipeline_mode<synchronous>, transform_indices = @transform_4, window_bounds = array<i64: 12, 8>}, {pipeline_mode = #tpu.pipeline_mode<synchronous>, transform_indices = @transform_5, window_bounds = array<i64: 1, 8>}, {pipeline_mode = #tpu.pipeline_mode<synchronous>, transform_indices = @transform_6, window_bounds = array<i64: 8, 32>}, {pipeline_mode = #tpu.pipeline_mode<synchronous>, transform_indices = @transform_7, window_bounds = array<i64: 1, 32>}, {transform_indices = @transform_8, window_bounds = array<i64: 16, 32>}]} {
    %c0 = arith.constant 0 : index
    %c0_0 = arith.constant 0 : index
    %0 = vector.load %arg1[%c0, %c0_0] : memref<16x32xf32, #tpu.memory_space<vmem>>, vector<16x32xf32>
    %c0_1 = arith.constant 0 : index
    %c0_2 = arith.constant 0 : index
    %1 = vector.load %arg2[%c0_1, %c0_2] : memref<16x12xf32, #tpu.memory_space<vmem>>, vector<16x12xf32>
    %c0_3 = arith.constant 0 : index
    %c0_4 = arith.constant 0 : index
    %2 = vector.load %arg3[%c0_3, %c0_4] : memref<32x8xf32, #tpu.memory_space<vmem>>, vector<32x8xf32>
    %cst = arith.constant dense<0.000000e+00> : vector<16x8xf32>
    %3 = tpu.matmul %0, %2, %cst {dimension_numbers = #tpu.dot_dimension_numbers<[1], [0], [0], [1], [0, 0, 1, 1], [], []>} : vector<16x32xf32>, vector<32x8xf32>, vector<16x8xf32> -> vector<16x8xf32>
    %c0_5 = arith.constant 0 : index
    %c0_6 = arith.constant 0 : index
    %4 = vector.load %arg4[%c0_5, %c0_6] : memref<1x8xf32, #tpu.memory_space<vmem>>, vector<1x8xf32>
    %5 = vector.broadcast %4 : vector<1x8xf32> to vector<16x8xf32>
    %6 = arith.addf %3, %5 : vector<16x8xf32>
    %c0_7 = arith.constant 0 : index
    %c0_8 = arith.constant 0 : index
    %7 = vector.load %arg5[%c0_7, %c0_8] : memref<12x8xf32, #tpu.memory_space<vmem>>, vector<12x8xf32>
    %cst_9 = arith.constant dense<0.000000e+00> : vector<16x8xf32>
    %8 = tpu.matmul %1, %7, %cst_9 {dimension_numbers = #tpu.dot_dimension_numbers<[1], [0], [0], [1], [0, 0, 1, 1], [], []>} : vector<16x12xf32>, vector<12x8xf32>, vector<16x8xf32> -> vector<16x8xf32>
    %c0_10 = arith.constant 0 : index
    %c0_11 = arith.constant 0 : index
    %9 = vector.load %arg6[%c0_10, %c0_11] : memref<1x8xf32, #tpu.memory_space<vmem>>, vector<1x8xf32>
    %10 = vector.broadcast %9 : vector<1x8xf32> to vector<16x8xf32>
    %11 = arith.addf %8, %10 : vector<16x8xf32>
    %12 = arith.mulf %6, %11 : vector<16x8xf32>
    %cst_12 = arith.constant 5.000000e-01 : f32
    %13 = vector.broadcast %cst_12 : f32 to vector<16x8xf32>
    %14 = arith.mulf %13, %12 : vector<16x8xf32>
    %cst_13 = arith.constant 0.707106769 : f32
    %15 = vector.broadcast %cst_13 : f32 to vector<16x8xf32>
    %16 = arith.mulf %12, %15 : vector<16x8xf32>
    %cst_14 = arith.constant 0.000000e+00 : f32
    %17 = vector.broadcast %cst_14 : f32 to vector<16x8xf32>
    %18 = arith.cmpf olt, %16, %17 : vector<16x8xf32>
    %cst_15 = arith.constant -1.000000e+00 : f32
    %cst_16 = arith.constant 1.000000e+00 : f32
    %19 = vector.broadcast %cst_15 : f32 to vector<16x8xf32>
    %20 = vector.broadcast %cst_16 : f32 to vector<16x8xf32>
    %21 = arith.select %18, %19, %20 : vector<16x8xi1>, vector<16x8xf32>
    %22 = math.absf %16 : vector<16x8xf32>
    %cst_17 = arith.constant 0.327591091 : f32
    %23 = vector.broadcast %cst_17 : f32 to vector<16x8xf32>
    %24 = arith.mulf %23, %22 : vector<16x8xf32>
    %cst_18 = arith.constant 1.000000e+00 : f32
    %25 = vector.broadcast %cst_18 : f32 to vector<16x8xf32>
    %26 = arith.addf %25, %24 : vector<16x8xf32>
    %cst_19 = arith.constant 1.000000e+00 : f32
    %27 = vector.broadcast %cst_19 : f32 to vector<16x8xf32>
    %28 = arith.divf %27, %26 : vector<16x8xf32>
    %cst_20 = arith.constant 1.06140542 : f32
    %29 = vector.broadcast %cst_20 : f32 to vector<16x8xf32>
    %30 = arith.mulf %28, %29 : vector<16x8xf32>
    %cst_21 = arith.constant -1.45315206 : f32
    %31 = vector.broadcast %cst_21 : f32 to vector<16x8xf32>
    %32 = arith.addf %31, %30 : vector<16x8xf32>
    %33 = arith.mulf %28, %32 : vector<16x8xf32>
    %cst_22 = arith.constant 1.42141378 : f32
    %34 = vector.broadcast %cst_22 : f32 to vector<16x8xf32>
    %35 = arith.addf %34, %33 : vector<16x8xf32>
    %36 = arith.mulf %28, %35 : vector<16x8xf32>
    %cst_23 = arith.constant -0.284496725 : f32
    %37 = vector.broadcast %cst_23 : f32 to vector<16x8xf32>
    %38 = arith.addf %37, %36 : vector<16x8xf32>
    %39 = arith.mulf %28, %38 : vector<16x8xf32>
    %cst_24 = arith.constant 0.254829586 : f32
    %40 = vector.broadcast %cst_24 : f32 to vector<16x8xf32>
    %41 = arith.addf %40, %39 : vector<16x8xf32>
    %42 = arith.mulf %28, %41 : vector<16x8xf32>
    %cst_25 = arith.constant 0.000000e+00 : f32
    %43 = vector.broadcast %cst_25 : f32 to vector<16x8xf32>
    %44 = arith.subf %43, %22 : vector<16x8xf32>
    %45 = arith.mulf %44, %22 : vector<16x8xf32>
    %46 = math.exp %45 : vector<16x8xf32>
    %47 = arith.mulf %42, %46 : vector<16x8xf32>
    %cst_26 = arith.constant 1.000000e+00 : f32
    %48 = vector.broadcast %cst_26 : f32 to vector<16x8xf32>
    %49 = arith.subf %48, %47 : vector<16x8xf32>
    %50 = arith.mulf %21, %49 : vector<16x8xf32>
    %cst_27 = arith.constant 1.000000e+00 : f32
    %51 = vector.broadcast %cst_27 : f32 to vector<16x8xf32>
    %52 = arith.addf %51, %50 : vector<16x8xf32>
    %53 = arith.mulf %14, %52 : vector<16x8xf32>
    %c0_28 = arith.constant 0 : index
    %c0_29 = arith.constant 0 : index
    %54 = vector.load %arg7[%c0_28, %c0_29] : memref<8x32xf32, #tpu.memory_space<vmem>>, vector<8x32xf32>
    %cst_30 = arith.constant dense<0.000000e+00> : vector<16x32xf32>
    %55 = tpu.matmul %53, %54, %cst_30 {dimension_numbers = #tpu.dot_dimension_numbers<[1], [0], [0], [1], [0, 0, 1, 1], [], []>} : vector<16x8xf32>, vector<8x32xf32>, vector<16x32xf32> -> vector<16x32xf32>
    %c0_31 = arith.constant 0 : index
    %c0_32 = arith.constant 0 : index
    %56 = vector.load %arg8[%c0_31, %c0_32] : memref<1x32xf32, #tpu.memory_space<vmem>>, vector<1x32xf32>
    %57 = vector.broadcast %56 : vector<1x32xf32> to vector<16x32xf32>
    %58 = arith.addf %55, %57 : vector<16x32xf32>
    %59 = arith.addf %58, %0 : vector<16x32xf32>
    %c0_33 = arith.constant 0 : index
    %c0_34 = arith.constant 0 : index
    %60 = vector.load %arg9[%c0_33, %c0_34] : memref<16x32xf32, #tpu.memory_space<vmem>>, vector<16x32xf32>
    tpu.vector_store %arg9[%c0_33, %c0_34], %59 {strides = array<i32>} : memref<16x32xf32, #tpu.memory_space<vmem>>, vector<16x32xf32>,
    return
  }
  func.func @transform_0(%arg0: i32) -> (i32, i32) {
    %c0_i32 = arith.constant 0 : i32
    %c0_i32_0 = arith.constant 0 : i32
    return %arg0, %c0_i32 : i32, i32
  }
  func.func @transform_1(%arg0: i32) -> (i32, i32) {
    %c0_i32 = arith.constant 0 : i32
    %c0_i32_0 = arith.constant 0 : i32
    return %arg0, %c0_i32 : i32, i32
  }
  func.func @transform_2(%arg0: i32) -> (i32, i32) {
    %c0_i32 = arith.constant 0 : i32
    %c0_i32_0 = arith.constant 0 : i32
    %c0_i32_1 = arith.constant 0 : i32
    return %c0_i32, %c0_i32_0 : i32, i32
  }
  func.func @transform_3(%arg0: i32) -> (i32, i32) {
    %c0_i32 = arith.constant 0 : i32
    %c0_i32_0 = arith.constant 0 : i32
    %c0_i32_1 = arith.constant 0 : i32
    return %c0_i32, %c0_i32_0 : i32, i32
  }
  func.func @transform_4(%arg0: i32) -> (i32, i32) {
    %c0_i32 = arith.constant 0 : i32
    %c0_i32_0 = arith.constant 0 : i32
    %c0_i32_1 = arith.constant 0 : i32
    return %c0_i32, %c0_i32_0 : i32, i32
  }
  func.func @transform_5(%arg0: i32) -> (i32, i32) {
    %c0_i32 = arith.constant 0 : i32
    %c0_i32_0 = arith.constant 0 : i32
    %c0_i32_1 = arith.constant 0 : i32
    return %c0_i32, %c0_i32_0 : i32, i32
  }
  func.func @transform_6(%arg0: i32) -> (i32, i32) {
    %c0_i32 = arith.constant 0 : i32
    %c0_i32_0 = arith.constant 0 : i32
    %c0_i32_1 = arith.constant 0 : i32
    return %c0_i32, %c0_i32_0 : i32, i32
  }
  func.func @transform_7(%arg0: i32) -> (i32, i32) {
    %c0_i32 = arith.constant 0 : i32
    %c0_i32_0 = arith.constant 0 : i32
    %c0_i32_1 = arith.constant 0 : i32
    return %c0_i32, %c0_i32_0 : i32, i32
  }
  func.func @transform_8(%arg0: i32) -> (i32, i32) {
    %c0_i32 = arith.constant 0 : i32
    %c0_i32_0 = arith.constant 0 : i32
    return %arg0, %c0_i32 : i32, i32
  }
}

</mosaic_0001>

<llo_original>
// kernel: tpu_custom_call.1
$region0: #{tpu_custom_call.1}
  #allocation0 [shape = 'u32[]', space=smem, size = 0x4, offset = 0x4, fixed_abs, tag = 'smem constant byte address 0x4 - core index']
  #allocation1 [shape = 'u32[144,128]{1,0:T(1,128)}', space=vmem, size = 0x12000, scoped, tag = 'internal scratch']
  %s0 = inlined_call_operand.vmem [shape: f32[16,32], index: 0, kind: input, shape index: {}]
  %s1 = inlined_call_operand.vmem [shape: f32[16,12], index: 1, kind: input, shape index: {}]
  %s2 = inlined_call_operand.vmem [shape: f32[32,8], index: 2, kind: input, shape index: {}]
  %s3 = inlined_call_operand.vmem [shape: f32[1,8], index: 3, kind: input, shape index: {}]
  %s4 = inlined_call_operand.vmem [shape: f32[12,8], index: 4, kind: input, shape index: {}]
  %s5 = inlined_call_operand.vmem [shape: f32[1,8], index: 5, kind: input, shape index: {}]
  %s6 = inlined_call_operand.vmem [shape: f32[8,32], index: 6, kind: input, shape index: {}]
  %s7 = inlined_call_operand.vmem [shape: f32[1,32], index: 7, kind: input, shape index: {}]
  %s8 = inlined_call_operand.hbm [shape: f32[16,32], index: 8, kind: output, shape index: {}]
  %s9 = sld [smem:[#allocation0]]
  $region42: #{tpu_custom_call.1} parent=0
    _
  %s11 = ssub.s32 1, %s9
  %s12 = scalar_select 0, %s11, %s9
  $region1: #{tpu_custom_call.1} parent=0
    #allocation2 [shape = 'u8[8192]{0}', space=vmem, size = 0x2000, scoped, tag = 'output window, operand 0, single buffered']
    #allocation3 [shape = 's32[1]{0}', space=sflag, size = 0x4, scoped, tag = 'scoped memory for tpu_custom_call.1']
    %13 = vsyncpa [#allocation3], 0
    // Predicated region
    $region2: #{tpu_custom_call.1} parent=1 // pred_check
      _
    $region3: #{tpu_custom_call.1} parent=1 // pred_check_branch
      %15 = sbr.rel (0) target = $region5
    $region4: #{tpu_custom_call.1} parent=1 // pred_region
      _
    $region5: #{tpu_custom_call.1} parent=1 // pred_fallthru
      _
    // Predicated region
    $region6: #{tpu_custom_call.1} parent=1 // pred_check
      _
    $region7: #{tpu_custom_call.1} parent=1 // pred_check_branch
      %17 = sbr.rel (0) target = $region9
    $region8: #{tpu_custom_call.1} parent=1 // pred_region
      _
    $region9: #{tpu_custom_call.1} parent=1 // pred_fallthru
      _
    // Predicated region
    $region10: #{tpu_custom_call.1} parent=1 // pred_check
      _
    $region11: #{tpu_custom_call.1} parent=1 // pred_check_branch
      %19 = sbr.rel (0) target = $region13
    $region12: #{tpu_custom_call.1} parent=1 // pred_region
      _
    $region13: #{tpu_custom_call.1} parent=1 // pred_fallthru
      _
    // Predicated region
    $region14: #{tpu_custom_call.1} parent=1 // pred_check
      _
    $region15: #{tpu_custom_call.1} parent=1 // pred_check_branch
      %21 = sbr.rel (0) target = $region17
    $region16: #{tpu_custom_call.1} parent=1 // pred_region
      _
    $region17: #{tpu_custom_call.1} parent=1 // pred_fallthru
      _
    // Predicated region
    $region18: #{tpu_custom_call.1} parent=1 // pred_check
      _
    $region19: #{tpu_custom_call.1} parent=1 // pred_check_branch
      %23 = sbr.rel (0) target = $region21
    $region20: #{tpu_custom_call.1} parent=1 // pred_region
      _
    $region21: #{tpu_custom_call.1} parent=1 // pred_fallthru
      _
    // Predicated region
    $region22: #{tpu_custom_call.1} parent=1 // pred_check
      _
    $region23: #{tpu_custom_call.1} parent=1 // pred_check_branch
      %25 = sbr.rel (0) target = $region25
    $region24: #{tpu_custom_call.1} parent=1 // pred_region
      _
    $region25: #{tpu_custom_call.1} parent=1 // pred_fallthru
      _
    // Predicated region
    $region26: #{tpu_custom_call.1} parent=1 // pred_check
      _
    $region27: #{tpu_custom_call.1} parent=1 // pred_check_branch
      %27 = sbr.rel (0) target = $region29
    $region28: #{tpu_custom_call.1} parent=1 // pred_region
      _
    $region29: #{tpu_custom_call.1} parent=1 // pred_fallthru
      _
    // Predicated region
    $region30: #{tpu_custom_call.1} parent=1 // pred_check
      _
    $region31: #{tpu_custom_call.1} parent=1 // pred_check_branch
      %29 = sbr.rel (0) target = $region33
    $region32: #{tpu_custom_call.1} parent=1 // pred_region
      _
    $region33: #{tpu_custom_call.1} parent=1 // pred_fallthru
      _
    %v30 = vld [vmem:[%s0] sm:$0xff]
    %v31 = vld [vmem:[%s0 + $0x8] sm:$0xff]
    %v32 = vld [vmem:[%s1] sm:$0xff]
    %v33 = vld [vmem:[%s1 + $0x8] sm:$0xff]
    %v34 = vld [vmem:[%s2] sm:$0xff]
    %v35 = vld [vmem:[%s2 + $0x8] sm:$0xff]
    %v36 = vld [vmem:[%s2 + $0x10] sm:$0xff]
    %v37 = vld [vmem:[%s2 + $0x18] sm:$0xff]
    %v38 = vld [vmem:[%s3] sm:$0x1]
    %v40 = vlaneseq
    %v41 = vshrl.u32 %v40, 7
    %v42 = vsub.s32 0, %v41
    %v43 = vrot.slane %v38, %v42
    %vm45 = vcmask 261120
    %v47 = vsel %vm45, %v30, 0
    %v50 = vsel %vm45, %v31, 0
    %52 = vmatprep.subr.mxu0 0.0
    %53 = vmatpush1.msra.mxu0 %v34
    %54 = vmatprep.subr.mxu0 0.0
    %55 = vmatpush1.msra.mxu0 %v35
    %56 = vmatprep.subr.mxu0 0.0
    %57 = vmatpush1.msra.mxu0 %v36
    %58 = vmatprep.subr.mxu0 0.0
    %59 = vmatpush1.msra.mxu0 %v37
    %60 = vmatprep.subr.mxu0 0.0
    %61 = vmatpush1.msra.mxu0 0.0
    %62 = vmatprep.subr.mxu0 0.0
    %63 = vmatpush1.msra.mxu0 0.0
    %64 = vmatprep.subr.mxu0 0.0
    %65 = vmatpush1.msra.mxu0 0.0
    %66 = vmatprep.subr.mxu0 0.0
    %67 = vmatpush1.msra.mxu0 0.0
    %68 = vmatprep.subr.mxu0 0.0
    %69 = vmatpush1.msra.mxu0 0.0
    %70 = vmatprep.subr.mxu0 0.0
    %71 = vmatpush1.msra.mxu0 0.0
    %72 = vmatprep.subr.mxu0 0.0
    %73 = vmatpush1.msra.mxu0 0.0
    %74 = vmatprep.subr.mxu0 0.0
    %75 = vmatpush1.msra.mxu0 0.0
    %76 = vmatprep.subr.mxu0 0.0
    %77 = vmatpush1.msra.mxu0 0.0
    %78 = vmatprep.subr.mxu0 0.0
    %79 = vmatpush1.msra.mxu0 0.0
    %80 = vmatprep.subr.mxu0 0.0
    %81 = vmatpush1.msra.mxu0 0.0
    %82 = vmatprep.subr.mxu0 0.0
    %83 = vmatpush1.msra.mxu0 0.0
    %84 = vmatprep.subr.mxu0 0.0
    %85 = vmatpush1.msra.mxu0 0.0
    %86 = vmatprep.subr.mxu0 0.0
    %87 = vmatpush1.msra.mxu0 0.0
    %88 = vmatprep.subr.mxu0 0.0
    %89 = vmatpush1.msra.mxu0 0.0
    %90 = vmatprep.subr.mxu0 0.0
    %91 = vmatpush1.msra.mxu0 0.0
    %92 = vmatprep.subr.mxu0 0.0
    %93 = vmatpush1.msra.mxu0 0.0
    %94 = vmatprep.subr.mxu0 0.0
    %95 = vmatpush1.msra.mxu0 0.0
    %96 = vmatprep.subr.mxu0 0.0
    %97 = vmatpush1.msra.mxu0 0.0
    %98 = vmatprep.subr.mxu0 0.0
    %99 = vmatpush1.msra.mxu0 0.0
    %100 = vmatprep.subr.mxu0 0.0
    %101 = vmatpush1.msra.mxu0 0.0
    %102 = vmatprep.subr.mxu0 0.0
    %103 = vmatpush1.msra.mxu0 0.0
    %104 = vmatprep.subr.mxu0 0.0
    %105 = vmatpush1.msra.mxu0 0.0
    %106 = vmatprep.subr.mxu0 0.0
    %107 = vmatpush1.msra.mxu0 0.0
    %108 = vmatprep.subr.mxu0 0.0
    %109 = vmatpush1.msra.mxu0 0.0
    %110 = vmatprep.subr.mxu0 0.0
    %111 = vmatpush1.msra.mxu0 0.0
    %112 = vmatprep.subr.mxu0 0.0
    %113 = vmatpush1.msra.mxu0 0.0
    %114 = vmatprep.subr.mxu0 0.0
    %115 = vmatpush1.msra.mxu0 0.0
    %116 = vmatprep.mubr.f32.mxu0 0.0
    %117 = vmatmul.mubr.f32.gmra.mrb[0].mxu0 %v47
    %v118 = vpop.f32.mrb[0].mxu0
    %v119 = vadd.f32 %v43, %v118
    %v120 = vpop.f32.mrb[0].mxu0
    %121 = vmatprep.mubr.f32.mxu0 0.0
    %122 = vmatmul.mubr.f32.gmra.mrb[0].mxu0 %v50
    %v123 = vpop.f32.mrb[0].mxu0
    %v124 = vadd.f32 %v43, %v123
    %v125 = vpop.f32.mrb[0].mxu0
    %126 = vdwg.mxu0
    %v127 = vld [vmem:[%s4] sm:$0xff]
    %v128 = vld [vmem:[%s4 + $0x8] sm:$0xf]
    %v129 = vld [vmem:[%s5] sm:$0x1]
    %v131 = vlaneseq
    %v132 = vshrl.u32 %v131, 7
    %v133 = vsub.s32 0, %v132
    %v134 = vrot.slane %v129, %v133
    %vm136 = vcmask 97280
    %v138 = vsel %vm136, %v32, 0
    %v141 = vsel %vm136, %v33, 0
    %vm143 = vcmask 1043456
    %v145 = vsel %vm143, %v128, 0
    %147 = vmatprep.subr.mxu0 0.0
    %148 = vmatpush1.msra.mxu0 %v127
    %149 = vmatprep.subr.mxu0 0.0
    %150 = vmatpush1.msra.mxu0 %v145
    %151 = vmatprep.subr.mxu0 0.0
    %152 = vmatpush1.msra.mxu0 0.0
    %153 = vmatprep.subr.mxu0 0.0
    %154 = vmatpush1.msra.mxu0 0.0
    %155 = vmatprep.subr.mxu0 0.0
    %156 = vmatpush1.msra.mxu0 0.0
    %157 = vmatprep.subr.mxu0 0.0
    %158 = vmatpush1.msra.mxu0 0.0
    %159 = vmatprep.subr.mxu0 0.0
    %160 = vmatpush1.msra.mxu0 0.0
    %161 = vmatprep.subr.mxu0 0.0
    %162 = vmatpush1.msra.mxu0 0.0
    %163 = vmatprep.subr.mxu0 0.0
    %164 = vmatpush1.msra.mxu0 0.0
    %165 = vmatprep.subr.mxu0 0.0
    %166 = vmatpush1.msra.mxu0 0.0
    %167 = vmatprep.subr.mxu0 0.0
    %168 = vmatpush1.msra.mxu0 0.0
    %169 = vmatprep.subr.mxu0 0.0
    %170 = vmatpush1.msra.mxu0 0.0
    %171 = vmatprep.subr.mxu0 0.0
    %172 = vmatpush1.msra.mxu0 0.0
    %173 = vmatprep.subr.mxu0 0.0
    %174 = vmatpush1.msra.mxu0 0.0
    %175 = vmatprep.subr.mxu0 0.0
    %176 = vmatpush1.msra.mxu0 0.0
    %177 = vmatprep.subr.mxu0 0.0
    %178 = vmatpush1.msra.mxu0 0.0
    %179 = vmatprep.subr.mxu0 0.0
    %180 = vmatpush1.msra.mxu0 0.0
    %181 = vmatprep.subr.mxu0 0.0
    %182 = vmatpush1.msra.mxu0 0.0
    %183 = vmatprep.subr.mxu0 0.0
    %184 = vmatpush1.msra.mxu0 0.0
    %185 = vmatprep.subr.mxu0 0.0
    %186 = vmatpush1.msra.mxu0 0.0
    %187 = vmatprep.subr.mxu0 0.0
    %188 = vmatpush1.msra.mxu0 0.0
    %189 = vmatprep.subr.mxu0 0.0
    %190 = vmatpush1.msra.mxu0 0.0
    %191 = vmatprep.subr.mxu0 0.0
    %192 = vmatpush1.msra.mxu0 0.0
    %193 = vmatprep.subr.mxu0 0.0
    %194 = vmatpush1.msra.mxu0 0.0
    %195 = vmatprep.subr.mxu0 0.0
    %196 = vmatpush1.msra.mxu0 0.0
    %197 = vmatprep.subr.mxu0 0.0
    %198 = vmatpush1.msra.mxu0 0.0
    %199 = vmatprep.subr.mxu0 0.0
    %200 = vmatpush1.msra.mxu0 0.0
    %201 = vmatprep.subr.mxu0 0.0
    %202 = vmatpush1.msra.mxu0 0.0
    %203 = vmatprep.subr.mxu0 0.0
    %204 = vmatpush1.msra.mxu0 0.0
    %205 = vmatprep.subr.mxu0 0.0
    %206 = vmatpush1.msra.mxu0 0.0
    %207 = vmatprep.subr.mxu0 0.0
    %208 = vmatpush1.msra.mxu0 0.0
    %209 = vmatprep.subr.mxu0 0.0
    %210 = vmatpush1.msra.mxu0 0.0
    %211 = vmatprep.mubr.f32.mxu0 0.0
    %212 = vmatmul.mubr.f32.gmra.mrb[0].mxu0 %v138
    %v213 = vpop.f32.mrb[0].mxu0
    %v214 = vadd.f32 %v134, %v213
    %v215 = vpop.f32.mrb[0].mxu0
    %216 = vmatprep.mubr.f32.mxu0 0.0
    %217 = vmatmul.mubr.f32.gmra.mrb[0].mxu0 %v141
    %v218 = vpop.f32.mrb[0].mxu0
    %v219 = vadd.f32 %v134, %v218
    %v220 = vpop.f32.mrb[0].mxu0
    %221 = vdwg.mxu0
    %v222 = vmul.f32 %v119, %v214
    %v223 = vmul.f32 %v124, %v219
    %v224 = vmul.f32 %v222, 0.5
    %v225 = vmul.f32 %v223, 0.5
    %v226 = vmul.f32 %v222, 0.70710677
    %v227 = vmul.f32 %v223, 0.70710677
    %vm228 = vcmp.lt.f32.partialorder %v226, 0.0
    %vm229 = vcmp.lt.f32.partialorder %v227, 0.0
    %v230 = vsel %vm228, -1.0, 1.0
    %v231 = vsel %vm229, -1.0, 1.0
    %v232 = vand.u32 2147483647, %v226
    %v233 = vand.u32 2147483647, %v227
    %v234 = vmul.f32 %v232, 0.3275911
    %v235 = vmul.f32 %v233, 0.3275911
    %v236 = vadd.f32 %v234, 1.0
    %v237 = vadd.f32 %v235, 1.0
    %v238 = vrcp.pop %v236
    %v239 = vmul.f32 1.0, %v238
    %v240 = vrcp.pop %v237
    %v241 = vmul.f32 1.0, %v240
    %v242 = vmul.f32 %v239, 1.0614054
    %v243 = vmul.f32 %v241, 1.0614054
    %v244 = vadd.f32 %v242, -1.4531521
    %v245 = vadd.f32 %v243, -1.4531521
    %v246 = vmul.f32 %v239, %v244
    %v247 = vmul.f32 %v241, %v245
    %v248 = vadd.f32 %v246, 1.4214138
    %v249 = vadd.f32 %v247, 1.4214138
    %v250 = vmul.f32 %v239, %v248
    %v251 = vmul.f32 %v241, %v249
    %v252 = vadd.f32 %v250, -0.28449672
    %v253 = vadd.f32 %v251, -0.28449672
    %v254 = vmul.f32 %v239, %v252
    %v255 = vmul.f32 %v241, %v253
    %v256 = vadd.f32 %v254, 0.2548296
    %v257 = vadd.f32 %v255, 0.2548296
    %v258 = vmul.f32 %v239, %v256
    %v259 = vmul.f32 %v241, %v257
    %v260 = vsub.f32 0.0, %v232
    %v261 = vsub.f32 0.0, %v233
    %v262 = vmul.f32 %v260, %v232
    %v263 = vmul.f32 %v261, %v233
    %v264 = vmul.f32 %v262, 1.442695
    %v265 = vpow.pop %v264
    %v266 = vmul.f32 %v263, 1.442695
    %v267 = vpow.pop %v266
    %v268 = vmul.f32 %v258, %v265
    %v269 = vmul.f32 %v259, %v267
    %v270 = vsub.f32 1.0, %v268
    %v271 = vsub.f32 1.0, %v269
    %v272 = vmul.f32 %v230, %v270
    %v273 = vmul.f32 %v231, %v271
    %v274 = vadd.f32 %v272, 1.0
    %v275 = vadd.f32 %v273, 1.0
    %v276 = vmul.f32 %v224, %v274
    %v277 = vmul.f32 %v225, %v275
    %v278 = vld [vmem:[%s6] sm:$0xff]
    %v279 = vld [vmem:[%s7] sm:$0x1]
    %v281 = vlaneseq
    %v282 = vshrl.u32 %v281, 7
    %v283 = vsub.s32 0, %v282
    %v284 = vrot.slane %v279, %v283
    %vm286 = vcmask 64512
    %v288 = vsel %vm286, %v276, 0
    %v291 = vsel %vm286, %v277, 0
    %293 = vmatprep.subr.mxu0 0.0
    %294 = vmatpush1.msra.mxu0 %v278
    %295 = vmatprep.subr.mxu0 0.0
    %296 = vmatpush1.msra.mxu0 0.0
    %297 = vmatprep.subr.mxu0 0.0
    %298 = vmatpush1.msra.mxu0 0.0
    %299 = vmatprep.subr.mxu0 0.0
    %300 = vmatpush1.msra.mxu0 0.0
    %301 = vmatprep.subr.mxu0 0.0
    %302 = vmatpush1.msra.mxu0 0.0
    %303 = vmatprep.subr.mxu0 0.0
    %304 = vmatpush1.msra.mxu0 0.0
    %305 = vmatprep.subr.mxu0 0.0
    %306 = vmatpush1.msra.mxu0 0.0
    %307 = vmatprep.subr.mxu0 0.0
    %308 = vmatpush1.msra.mxu0 0.0
    %309 = vmatprep.subr.mxu0 0.0
    %310 = vmatpush1.msra.mxu0 0.0
    %311 = vmatprep.subr.mxu0 0.0
    %312 = vmatpush1.msra.mxu0 0.0
    %313 = vmatprep.subr.mxu0 0.0
    %314 = vmatpush1.msra.mxu0 0.0
    %315 = vmatprep.subr.mxu0 0.0
    %316 = vmatpush1.msra.mxu0 0.0
    %317 = vmatprep.subr.mxu0 0.0
    %318 = vmatpush1.msra.mxu0 0.0
    %319 = vmatprep.subr.mxu0 0.0
    %320 = vmatpush1.msra.mxu0 0.0
    %321 = vmatprep.subr.mxu0 0.0
    %322 = vmatpush1.msra.mxu0 0.0
    %323 = vmatprep.subr.mxu0 0.0
    %324 = vmatpush1.msra.mxu0 0.0
    %325 = vmatprep.subr.mxu0 0.0
    %326 = vmatpush1.msra.mxu0 0.0
    %327 = vmatprep.subr.mxu0 0.0
    %328 = vmatpush1.msra.mxu0 0.0
    %329 = vmatprep.subr.mxu0 0.0
    %330 = vmatpush1.msra.mxu0 0.0
    %331 = vmatprep.subr.mxu0 0.0
    %332 = vmatpush1.msra.mxu0 0.0
    %333 = vmatprep.subr.mxu0 0.0
    %334 = vmatpush1.msra.mxu0 0.0
    %335 = vmatprep.subr.mxu0 0.0
    %336 = vmatpush1.msra.mxu0 0.0
    %337 = vmatprep.subr.mxu0 0.0
    %338 = vmatpush1.msra.mxu0 0.0
    %339 = vmatprep.subr.mxu0 0.0
    %340 = vmatpush1.msra.mxu0 0.0
    %341 = vmatprep.subr.mxu0 0.0
    %342 = vmatpush1.msra.mxu0 0.0
    %343 = vmatprep.subr.mxu0 0.0
    %344 = vmatpush1.msra.mxu0 0.0
    %345 = vmatprep.subr.mxu0 0.0
    %346 = vmatpush1.msra.mxu0 0.0
    %347 = vmatprep.subr.mxu0 0.0
    %348 = vmatpush1.msra.mxu0 0.0
    %349 = vmatprep.subr.mxu0 0.0
    %350 = vmatpush1.msra.mxu0 0.0
    %351 = vmatprep.subr.mxu0 0.0
    %352 = vmatpush1.msra.mxu0 0.0
    %353 = vmatprep.subr.mxu0 0.0
    %354 = vmatpush1.msra.mxu0 0.0
    %355 = vmatprep.subr.mxu0 0.0
    %356 = vmatpush1.msra.mxu0 0.0
    %357 = vmatprep.mubr.f32.mxu0 0.0
    %358 = vmatmul.mubr.f32.gmra.mrb[0].mxu0 %v288
    %v359 = vpop.f32.mrb[0].mxu0
    %v360 = vadd.f32 %v284, %v359
    %v361 = vpop.f32.mrb[0].mxu0
    %362 = vmatprep.mubr.f32.mxu0 0.0
    %363 = vmatmul.mubr.f32.gmra.mrb[0].mxu0 %v291
    %v364 = vpop.f32.mrb[0].mxu0
    %v365 = vadd.f32 %v284, %v364
    %v366 = vpop.f32.mrb[0].mxu0
    %367 = vdwg.mxu0
    %v368 = vadd.f32 %v360, %v30
    %v369 = vadd.f32 %v365, %v31
    %370 = vst.msk [vmem:[#allocation2] sm:$0xff] %vm45, %v368
    %371 = vst.msk [vmem:[#allocation2 + $0x8] sm:$0xff] %vm45, %v369
    // Predicated region
    $region34: #{tpu_custom_call.1} parent=1 // pred_check
      _
    $region35: #{tpu_custom_call.1} parent=1 // pred_check_branch
      %373 = sbr.rel (0) target = $region37
    $region36: #{tpu_custom_call.1} parent=1 // pred_region
      %s375 = ssub.s32 256, 256
      %376 = vsyncadd [#allocation3], %s375
      %s377 = sshll.u32 [#allocation2], 4
      %s378 = int_to_ptr.vmem [resolvable:$true] %s377
      %383 = dma.vmem_to_hbm [thread:$0]  %s378, 256, %s8, [#allocation3], 128, 128, 8
    $region37: #{tpu_custom_call.1} parent=1 // pred_fallthru
      _
    // Predicated region
    $region38: #{tpu_custom_call.1} parent=1 // pred_check
      _
    $region39: #{tpu_custom_call.1} parent=1 // pred_check_branch
      %385 = sbr.rel (0) target = $region41
    $region40: #{tpu_custom_call.1} parent=1 // pred_region
      %386 = dma.done [#allocation3], 256
    $region41: #{tpu_custom_call.1} parent=1 // pred_fallthru
      _
    %387 = vsyncpa [#allocation3], 1

</llo_original>
